<compile_context>
chip_gen: v6e
topology: v6e:2x2x1
jax: 0.10.0
libtpu: 0.0.40
codegen_flags: <defaults>
</compile_context>

<pallas_src>
import jax
import jax.numpy as jnp
from jax.experimental import pallas as pl
from jax.experimental.pallas import tpu as pltpu


def _round_up(x: int, m: int) -> int:
    return ((x + m - 1) // m) * m


def _mlp_kernel(x_ref, w1_ref, b1_ref, w2_ref, b2_ref, w3_ref, b3_ref, o_ref):
    """Fused 3-layer MLP: relu(x@W1+b1) -> relu(@W2+b2) -> @W3+b3."""
    x = x_ref[...].astype(jnp.bfloat16)  # f32 in HBM/VMEM, bf16 into the MXU

    h1 = jnp.dot(x, w1_ref[...], preferred_element_type=jnp.float32) + b1_ref[...]
    h1 = jnp.maximum(h1, 0.0)

    h2 = jnp.dot(h1.astype(jnp.bfloat16), w2_ref[...],
                 preferred_element_type=jnp.float32) + b2_ref[...]
    h2 = jnp.maximum(h2, 0.0)

    o_ref[...] = jnp.dot(h2.astype(jnp.bfloat16), w3_ref[...],
                         preferred_element_type=jnp.float32) + b3_ref[...]


def _vmem_estimate(bt: int, D: int, C: int, H1: int, H2p: int) -> int:
    """Rough VMEM bytes: double-buffered x/out tiles + weights + live f32 temps."""
    return (2 * bt * D * 4                              # x tile (f32, 2 bufs)
            + 2 * bt * C * 4                            # out tile (f32, 2 bufs)
            + 2 * (D * H1 + H1 * H2p + H2p * C) * 2     # bf16 weights (2 bufs)
            + 2 * (H1 + H2p + C) * 4                    # f32 biases
            + 4 * bt * H1 * 4)                          # in-kernel intermediates headroom


def _choose_batch_tile(B8: int, D: int, C: int, H1: int, H2p: int):
    """Pick (bt, B_pad): minimize padding waste, keep >=2 parallel grid steps
    once B_pad >= 256 (v7x dual-TC), stay inside a conservative VMEM budget."""
    budget = 32 << 20

    def fits(bt):
        return _vmem_estimate(bt, D, C, H1, H2p) <= budget

    if B8 <= 128:
        bt = B8
        while bt > 8 and not fits(bt):
            bt -= 8
        return bt, _round_up(B8, bt)

    cands = [c for c in (128, 256, 512, 1024) if fits(c)]
    if not cands:
        bt = 128
        while bt > 8 and not fits(bt):
            bt -= 8
        return bt, _round_up(B8, bt)

    best = None
    for bt in cands:
        B_pad = _round_up(B8, bt)
        steps = B_pad // bt
        ok_par = (B_pad < 256) or (steps >= 2)   # keep both v7x TCs busy
        key = (0 if ok_par else 1, B_pad - B8, -bt)
        if best is None or key < best[0]:
            best = (key, bt, B_pad)
    return best[1], best[2]


def prepare_params(params):
    """One-time weight prep (hoisted out of the per-call path).

    bf16 cast of weights, H2 zero-padded 64 -> 128 (exact: relu(0)=0 columns
    multiply zero rows of w3), biases kept f32 as (1, N) rows.
    """
    H1 = params["w1"].shape[1]
    H2 = params["w2"].shape[1]
    H2p = _round_up(H2, 128)
    C = params["w3"].shape[1]
    return {
        "w1": params["w1"].astype(jnp.bfloat16),                                  # (D, 128)
        "b1": params["b1"].astype(jnp.float32).reshape(1, H1),
        "w2": jnp.pad(params["w2"].astype(jnp.bfloat16), ((0, 0), (0, H2p - H2))),  # (128, 128)
        "b2": jnp.pad(params["b2"].astype(jnp.float32), (0, H2p - H2)).reshape(1, H2p),
        "w3": jnp.pad(params["w3"].astype(jnp.bfloat16), ((0, H2p - H2), (0, 0))),  # (128, C)
        "b3": params["b3"].astype(jnp.float32).reshape(1, C),
    }


@jax.jit
def chance_encoder_backbone_mlp(x, prepared):
    """Run the fused MLP kernel.

    Args:
      x: (B, input_dim) float32 observations (any B; rows padded internally
         only when B is not already a multiple of the chosen tile).
      prepared: output of prepare_params() (bf16/padded weights, f32 biases).
    Returns:
      (B, chance_encoding_dim) float32 chance encodings.
    """
    B, D = x.shape
    w1, b1 = prepared["w1"], prepared["b1"]
    w2, b2 = prepared["w2"], prepared["b2"]
    w3, b3 = prepared["w3"], prepared["b3"]
    H1, H2p, C = w1.shape[1], w2.shape[1], w3.shape[1]
    assert w1.shape[0] == D, "prepared params do not match input_dim"

    B8 = _round_up(max(B, 8), 8)
    bt, B_pad = _choose_batch_tile(B8, D, C, H1, H2p)

    # Only pad rows (cheap) and only when needed; x stays f32 / unpadded in D.
    x_in = x if B_pad == B else jnp.pad(x, ((0, B_pad - B), (0, 0)))

    grid = (B_pad // bt,)
    rep = lambda i: (0, 0)  # weights/biases replicated across batch tiles

    flops = 2 * B_pad * (D * H1 + H1 * H2p + H2p * C)
    bytes_accessed = (
        B_pad * D * 4                                 # f32 activations in
        + (w1.size + w2.size + w3.size) * 2           # bf16 weights
        + (b1.size + b2.size + b3.size) * 4           # f32 biases
        + B_pad * C * 4                               # f32 output (lane-narrow, tiny)
    )
    vmem_limit = int(min(48 << 20,
                         max(32 << 20,
                             int(1.25 * _vmem_estimate(bt, D, C, H1, H2p)) + (2 << 20))))

    out = pl.pallas_call(
        _mlp_kernel,
        out_shape=jax.ShapeDtypeStruct((B_pad, C), jnp.float32),
        grid_spec=pltpu.PrefetchScalarGridSpec(
            num_scalar_prefetch=0,
            grid=grid,
            in_specs=[
                pl.BlockSpec((bt, D), lambda i: (i, 0)),   # x tile (last dim == full dim)
                pl.BlockSpec((D, H1), rep),                # w1
                pl.BlockSpec((1, H1), rep),                # b1
                pl.BlockSpec((H1, H2p), rep),              # w2 (H2 padded to 128)
                pl.BlockSpec((1, H2p), rep),               # b2
                pl.BlockSpec((H2p, C), rep),               # w3 (last dim == full dim)
                pl.BlockSpec((1, C), rep),                 # b3
            ],
            out_specs=pl.BlockSpec((bt, C), lambda i: (i, 0)),
        ),
        compiler_params=pltpu.CompilerParams(
            dimension_semantics=("parallel",),
            vmem_limit_bytes=vmem_limit,
        ),
        cost_estimate=pl.CostEstimate(
            flops=flops, transcendentals=0, bytes_accessed=bytes_accessed),
    )(x_in, w1, b1, w2, b2, w3, b3)

    return out if B_pad == B else out[:B]


def init_params(key, input_dim, chance_encoding_dim=4):
    """Deterministic init mimicking torch.nn.Linear (uniform +/- 1/sqrt(fan_in)).

    Weights are stored as (in_features, out_features) for the x @ W layout,
    which is the same math as torch's x @ W.T + b.
    """
    dims = [(input_dim, 128), (128, 64), (64, chance_encoding_dim)]
    params = {}
    keys = jax.random.split(key, 2 * len(dims))
    for idx, (fan_in, fan_out) in enumerate(dims):
        bound = 1.0 / (fan_in ** 0.5)
        params[f"w{idx + 1}"] = jax.random.uniform(
            keys[2 * idx], (fan_in, fan_out), jnp.float32, -bound, bound)
        params[f"b{idx + 1}"] = jax.random.uniform(
            keys[2 * idx + 1], (fan_out,), jnp.float32, -bound, bound)
    return params


def reference_forward_f32(x, params):
    """Pure-f32 reference (matches the PyTorch module exactly)."""
    h = jnp.maximum(x @ params["w1"] + params["b1"], 0.0)
    h = jnp.maximum(h @ params["w2"] + params["b2"], 0.0)
    return h @ params["w3"] + params["b3"]


def reference_forward_bf16(x, params):
    """Reference with the same bf16-operand / f32-accumulate recipe as the kernel."""
    xb = x.astype(jnp.bfloat16)
    h = jnp.dot(xb, params["w1"].astype(jnp.bfloat16),
                preferred_element_type=jnp.float32) + params["b1"]
    h = jnp.maximum(h, 0.0).astype(jnp.bfloat16)
    h = jnp.dot(h, params["w2"].astype(jnp.bfloat16),
                preferred_element_type=jnp.float32) + params["b2"]
    h = jnp.maximum(h, 0.0).astype(jnp.bfloat16)
    return jnp.dot(h, params["w3"].astype(jnp.bfloat16),
                   preferred_element_type=jnp.float32) + params["b3"]


if __name__ == "__main__":
    key = jax.random.PRNGKey(0)
    k_x, k_p, k_x2, k_x3 = jax.random.split(key, 4)

    batch = 8
    input_dim = 32
    chance_encoding_dim = 4

    x = jax.random.normal(k_x, (batch, input_dim), jnp.float32)
    params = init_params(k_p, input_dim, chance_encoding_dim)
    prepared = prepare_params(params)   # one-time weight prep (hoisted)

    out = jax.block_until_ready(chance_encoder_backbone_mlp(x, prepared))
    assert out.shape == (batch, chance_encoding_dim)

    # Kernel matches a reference using the identical bf16-operand recipe ...
    ref_bf16 = reference_forward_bf16(x, params)
    assert jnp.allclose(out, ref_bf16, atol=2e-3, rtol=2e-3), "mismatch vs bf16 reference"
    # ... and stays close to the exact f32 (PyTorch-equivalent) forward.
    ref_f32 = reference_forward_f32(x, params)
    assert jnp.allclose(out, ref_f32, atol=5e-2, rtol=5e-2), "mismatch vs f32 reference"

    # Batch-padding path (batch not a multiple of 8).
    x2 = jax.random.normal(k_x2, (20, input_dim), jnp.float32)
    out2 = jax.block_until_ready(chance_encoder_backbone_mlp(x2, prepared))
    assert out2.shape == (20, chance_encoding_dim)
    assert jnp.allclose(out2, reference_forward_f32(x2, params), atol=5e-2, rtol=5e-2)

    # Multi-tile grid path (>= 2 "parallel" grid steps).
    x3 = jax.random.normal(k_x3, (200, input_dim), jnp.float32)
    out3 = jax.block_until_ready(chance_encoder_backbone_mlp(x3, prepared))
    assert out3.shape == (200, chance_encoding_dim)
    assert jnp.allclose(out3, reference_forward_f32(x3, params), atol=5e-2, rtol=5e-2)

    print("KERNEL_OK")
</pallas_src>

<mosaic_0001>
module attributes {stable_mosaic.version = 11 : i64} {
  func.func @_mlp_kernel(%arg0: i32, %arg1: memref<8x32xf32, #tpu.memory_space<vmem>>, %arg2: memref<32x128xbf16, #tpu.memory_space<vmem>>, %arg3: memref<1x128xf32, #tpu.memory_space<vmem>>, %arg4: memref<128x128xbf16, #tpu.memory_space<vmem>>, %arg5: memref<1x128xf32, #tpu.memory_space<vmem>>, %arg6: memref<128x4xbf16, #tpu.memory_space<vmem>>, %arg7: memref<1x4xf32, #tpu.memory_space<vmem>>, %arg8: memref<8x4xf32, #tpu.memory_space<vmem>>) attributes {dimension_semantics = [#tpu.dimension_semantics<parallel>], iteration_bounds = array<i64: 1>, scalar_prefetch = 0 : i64, scratch_operands = 0 : i64, tpu.core_type = #tpu.core_type<tc>, window_params = [{transform_indices = @transform_0, window_bounds = array<i64: 8, 32>}, {pipeline_mode = #tpu.pipeline_mode<synchronous>, transform_indices = @transform_1, window_bounds = array<i64: 32, 128>}, {pipeline_mode = #tpu.pipeline_mode<synchronous>, transform_indices = @transform_2, window_bounds = array<i64: 1, 128>}, {pipeline_mode = #tpu.pipeline_mode<synchronous>, transform_indices = @transform_3, window_bounds = array<i64: 128, 128>}, {pipeline_mode = #tpu.pipeline_mode<synchronous>, transform_indices = @transform_4, window_bounds = array<i64: 1, 128>}, {pipeline_mode = #tpu.pipeline_mode<synchronous>, transform_indices = @transform_5, window_bounds = array<i64: 128, 4>}, {pipeline_mode = #tpu.pipeline_mode<synchronous>, transform_indices = @transform_6, window_bounds = array<i64: 1, 4>}, {transform_indices = @transform_7, window_bounds = array<i64: 8, 4>}]} {
    %c0 = arith.constant 0 : index
    %c0_0 = arith.constant 0 : index
    %0 = vector.load %arg1[%c0, %c0_0] : memref<8x32xf32, #tpu.memory_space<vmem>>, vector<8x32xf32>
    %1 = arith.truncf %0 : vector<8x32xf32> to vector<8x32xbf16>
    %c0_1 = arith.constant 0 : index
    %c0_2 = arith.constant 0 : index
    %2 = vector.load %arg2[%c0_1, %c0_2] : memref<32x128xbf16, #tpu.memory_space<vmem>>, vector<32x128xbf16>
    %cst = arith.constant dense<0.000000e+00> : vector<8x128xf32>
    %3 = tpu.matmul %1, %2, %cst {dimension_numbers = #tpu.dot_dimension_numbers<[1], [0], [0], [1], [0, 0, 1, 1], [], []>} : vector<8x32xbf16>, vector<32x128xbf16>, vector<8x128xf32> -> vector<8x128xf32>
    %c0_3 = arith.constant 0 : index
    %c0_4 = arith.constant 0 : index
    %4 = vector.load %arg3[%c0_3, %c0_4] : memref<1x128xf32, #tpu.memory_space<vmem>>, vector<1x128xf32>
    %5 = vector.broadcast %4 : vector<1x128xf32> to vector<8x128xf32>
    %6 = arith.addf %3, %5 : vector<8x128xf32>
    %cst_5 = arith.constant 0.000000e+00 : f32
    %7 = vector.broadcast %cst_5 : f32 to vector<8x128xf32>
    %8 = arith.maximumf %6, %7 : vector<8x128xf32>
    %9 = arith.truncf %8 : vector<8x128xf32> to vector<8x128xbf16>
    %c0_6 = arith.constant 0 : index
    %c0_7 = arith.constant 0 : index
    %10 = vector.load %arg4[%c0_6, %c0_7] : memref<128x128xbf16, #tpu.memory_space<vmem>>, vector<128x128xbf16>
    %cst_8 = arith.constant dense<0.000000e+00> : vector<8x128xf32>
    %11 = tpu.matmul %9, %10, %cst_8 {dimension_numbers = #tpu.dot_dimension_numbers<[1], [0], [0], [1], [0, 0, 1, 1], [], []>} : vector<8x128xbf16>, vector<128x128xbf16>, vector<8x128xf32> -> vector<8x128xf32>
    %c0_9 = arith.constant 0 : index
    %c0_10 = arith.constant 0 : index
    %12 = vector.load %arg5[%c0_9, %c0_10] : memref<1x128xf32, #tpu.memory_space<vmem>>, vector<1x128xf32>
    %13 = vector.broadcast %12 : vector<1x128xf32> to vector<8x128xf32>
    %14 = arith.addf %11, %13 : vector<8x128xf32>
    %cst_11 = arith.constant 0.000000e+00 : f32
    %15 = vector.broadcast %cst_11 : f32 to vector<8x128xf32>
    %16 = arith.maximumf %14, %15 : vector<8x128xf32>
    %17 = arith.truncf %16 : vector<8x128xf32> to vector<8x128xbf16>
    %c0_12 = arith.constant 0 : index
    %c0_13 = arith.constant 0 : index
    %18 = vector.load %arg6[%c0_12, %c0_13] : memref<128x4xbf16, #tpu.memory_space<vmem>>, vector<128x4xbf16>
    %cst_14 = arith.constant dense<0.000000e+00> : vector<8x4xf32>
    %19 = tpu.matmul %17, %18, %cst_14 {dimension_numbers = #tpu.dot_dimension_numbers<[1], [0], [0], [1], [0, 0, 1, 1], [], []>} : vector<8x128xbf16>, vector<128x4xbf16>, vector<8x4xf32> -> vector<8x4xf32>
    %c0_15 = arith.constant 0 : index
    %c0_16 = arith.constant 0 : index
    %20 = vector.load %arg7[%c0_15, %c0_16] : memref<1x4xf32, #tpu.memory_space<vmem>>, vector<1x4xf32>
    %21 = vector.broadcast %20 : vector<1x4xf32> to vector<8x4xf32>
    %22 = arith.addf %19, %21 : vector<8x4xf32>
    %c0_17 = arith.constant 0 : index
    %c0_18 = arith.constant 0 : index
    %23 = vector.load %arg8[%c0_17, %c0_18] : memref<8x4xf32, #tpu.memory_space<vmem>>, vector<8x4xf32>
    tpu.vector_store %arg8[%c0_17, %c0_18], %22 {strides = array<i32>} : memref<8x4xf32, #tpu.memory_space<vmem>>, vector<8x4xf32>,
    return
  }
  func.func @transform_0(%arg0: i32) -> (i32, i32) {
    %c0_i32 = arith.constant 0 : i32
    %c0_i32_0 = arith.constant 0 : i32
    return %arg0, %c0_i32 : i32, i32
  }
  func.func @transform_1(%arg0: i32) -> (i32, i32) {
    %c0_i32 = arith.constant 0 : i32
    %c0_i32_0 = arith.constant 0 : i32
    %c0_i32_1 = arith.constant 0 : i32
    return %c0_i32, %c0_i32_0 : i32, i32
  }
  func.func @transform_2(%arg0: i32) -> (i32, i32) {
    %c0_i32 = arith.constant 0 : i32
    %c0_i32_0 = arith.constant 0 : i32
    %c0_i32_1 = arith.constant 0 : i32
    return %c0_i32, %c0_i32_0 : i32, i32
  }
  func.func @transform_3(%arg0: i32) -> (i32, i32) {
    %c0_i32 = arith.constant 0 : i32
    %c0_i32_0 = arith.constant 0 : i32
    %c0_i32_1 = arith.constant 0 : i32
    return %c0_i32, %c0_i32_0 : i32, i32
  }
  func.func @transform_4(%arg0: i32) -> (i32, i32) {
    %c0_i32 = arith.constant 0 : i32
    %c0_i32_0 = arith.constant 0 : i32
    %c0_i32_1 = arith.constant 0 : i32
    return %c0_i32, %c0_i32_0 : i32, i32
  }
  func.func @transform_5(%arg0: i32) -> (i32, i32) {
    %c0_i32 = arith.constant 0 : i32
    %c0_i32_0 = arith.constant 0 : i32
    %c0_i32_1 = arith.constant 0 : i32
    return %c0_i32, %c0_i32_0 : i32, i32
  }
  func.func @transform_6(%arg0: i32) -> (i32, i32) {
    %c0_i32 = arith.constant 0 : i32
    %c0_i32_0 = arith.constant 0 : i32
    %c0_i32_1 = arith.constant 0 : i32
    return %c0_i32, %c0_i32_0 : i32, i32
  }
  func.func @transform_7(%arg0: i32) -> (i32, i32) {
    %c0_i32 = arith.constant 0 : i32
    %c0_i32_0 = arith.constant 0 : i32
    return %arg0, %c0_i32 : i32, i32
  }
}

</mosaic_0001>

<llo_original>
// kernel: chance_encoder_backbone_mlp.1
$region0: #{chance_encoder_backbone_mlp.1}
  #allocation0 [shape = 'u32[]', space=smem, size = 0x4, offset = 0x4, fixed_abs, tag = 'smem constant byte address 0x4 - core index']
  #allocation1 [shape = 'u32[144,128]{1,0:T(1,128)}', space=vmem, size = 0x12000, scoped, tag = 'internal scratch']
  %s0 = inlined_call_operand.vmem [shape: f32[8,32], index: 0, kind: input, shape index: {}]
  %s1 = inlined_call_operand.hbm [shape: bf16[32,128], index: 1, kind: input, shape index: {}]
  %s2 = inlined_call_operand.vmem [shape: f32[1,128], index: 2, kind: input, shape index: {}]
  %s3 = inlined_call_operand.vmem [shape: bf16[128,128], index: 3, kind: input, shape index: {}]
  %s4 = inlined_call_operand.vmem [shape: f32[1,128], index: 4, kind: input, shape index: {}]
  %s5 = inlined_call_operand.vmem [shape: bf16[128,4], index: 5, kind: input, shape index: {}]
  %s6 = inlined_call_operand.hbm [shape: f32[1,4], index: 6, kind: input, shape index: {}]
  %s7 = inlined_call_operand.vmem [shape: f32[8,4], index: 7, kind: output, shape index: {}]
  %s8 = sld [smem:[#allocation0]]
  $region46: #{chance_encoder_backbone_mlp.1} parent=0
    _
  %s10 = ssub.s32 1, %s8
  %s11 = scalar_select 0, %s10, %s8
  $region1: #{chance_encoder_backbone_mlp.1} parent=0
    #allocation2 [shape = 'u8[8192]{0}', space=vmem, size = 0x2000, scoped, tag = 'input window, operand 1, single buffered']
    #allocation3 [shape = 's32[1]{0}', space=sflag, size = 0x4, scoped, tag = 'scoped memory for chance_encoder_backbone_mlp.1']
    #allocation4 [shape = 'u8[512]{0}', space=vmem, size = 0x400, scoped, tag = 'input window, operand 6, single buffered']
    #allocation5 [shape = 's32[1]{0}', space=sflag, size = 0x4, scoped, tag = 'scoped memory for chance_encoder_backbone_mlp.1']
    %12 = vsyncpa [#allocation3], 0
    %13 = vsyncpa [#allocation5], 0
    // Predicated region
    $region2: #{chance_encoder_backbone_mlp.1} parent=1 // pred_check
      _
    $region3: #{chance_encoder_backbone_mlp.1} parent=1 // pred_check_branch
      %15 = sbr.rel (0) target = $region5
    $region4: #{chance_encoder_backbone_mlp.1} parent=1 // pred_region
      _
    $region5: #{chance_encoder_backbone_mlp.1} parent=1 // pred_fallthru
      _
    // Predicated region
    $region6: #{chance_encoder_backbone_mlp.1} parent=1 // pred_check
      _
    $region7: #{chance_encoder_backbone_mlp.1} parent=1 // pred_check_branch
      %17 = sbr.rel (0) target = $region9
    $region8: #{chance_encoder_backbone_mlp.1} parent=1 // pred_region
      %s19 = ssub.s32 256, 256
      %20 = vsyncadd [#allocation3], %s19
      %s21 = sshll.u32 [#allocation2], 4
      %s22 = int_to_ptr.vmem [resolvable:$true] %s21
      %27 = dma.hbm_to_vmem [thread:$0]  %s1, 256, %s22, [#allocation3], 64, 64, 4
    $region9: #{chance_encoder_backbone_mlp.1} parent=1 // pred_fallthru
      _
    // Predicated region
    $region10: #{chance_encoder_backbone_mlp.1} parent=1 // pred_check
      _
    $region11: #{chance_encoder_backbone_mlp.1} parent=1 // pred_check_branch
      %29 = sbr.rel (0) target = $region13
    $region12: #{chance_encoder_backbone_mlp.1} parent=1 // pred_region
      _
    $region13: #{chance_encoder_backbone_mlp.1} parent=1 // pred_fallthru
      _
    // Predicated region
    $region14: #{chance_encoder_backbone_mlp.1} parent=1 // pred_check
      _
    $region15: #{chance_encoder_backbone_mlp.1} parent=1 // pred_check_branch
      %31 = sbr.rel (0) target = $region17
    $region16: #{chance_encoder_backbone_mlp.1} parent=1 // pred_region
      _
    $region17: #{chance_encoder_backbone_mlp.1} parent=1 // pred_fallthru
      _
    // Predicated region
    $region18: #{chance_encoder_backbone_mlp.1} parent=1 // pred_check
      _
    $region19: #{chance_encoder_backbone_mlp.1} parent=1 // pred_check_branch
      %33 = sbr.rel (0) target = $region21
    $region20: #{chance_encoder_backbone_mlp.1} parent=1 // pred_region
      _
    $region21: #{chance_encoder_backbone_mlp.1} parent=1 // pred_fallthru
      _
    // Predicated region
    $region22: #{chance_encoder_backbone_mlp.1} parent=1 // pred_check
      _
    $region23: #{chance_encoder_backbone_mlp.1} parent=1 // pred_check_branch
      %35 = sbr.rel (0) target = $region25
    $region24: #{chance_encoder_backbone_mlp.1} parent=1 // pred_region
      _
    $region25: #{chance_encoder_backbone_mlp.1} parent=1 // pred_fallthru
      _
    // Predicated region
    $region26: #{chance_encoder_backbone_mlp.1} parent=1 // pred_check
      _
    $region27: #{chance_encoder_backbone_mlp.1} parent=1 // pred_check_branch
      %37 = sbr.rel (0) target = $region29
    $region28: #{chance_encoder_backbone_mlp.1} parent=1 // pred_region
      %s39 = ssub.s32 16, 16
      %40 = vsyncadd [#allocation5], %s39
      %s42 = sshll.u32 [#allocation4], 4
      %s43 = int_to_ptr.vmem [resolvable:$true] %s42
      %45 = dma.hbm_to_vmem [thread:$0]  %s6, 16, %s43, [#allocation5]
    $region29: #{chance_encoder_backbone_mlp.1} parent=1 // pred_fallthru
      _
    // Predicated region
    $region30: #{chance_encoder_backbone_mlp.1} parent=1 // pred_check
      _
    $region31: #{chance_encoder_backbone_mlp.1} parent=1 // pred_check_branch
      %47 = sbr.rel (0) target = $region33
    $region32: #{chance_encoder_backbone_mlp.1} parent=1 // pred_region
      %48 = dma.done [#allocation3], 256
    $region33: #{chance_encoder_backbone_mlp.1} parent=1 // pred_fallthru
      _
    // Predicated region
    $region34: #{chance_encoder_backbone_mlp.1} parent=1 // pred_check
      _
    $region35: #{chance_encoder_backbone_mlp.1} parent=1 // pred_check_branch
      %50 = sbr.rel (0) target = $region37
    $region36: #{chance_encoder_backbone_mlp.1} parent=1 // pred_region
      %51 = dma.done [#allocation5], 16
    $region37: #{chance_encoder_backbone_mlp.1} parent=1 // pred_fallthru
      _
    %v53 = vld [vmem:[%s0] sm:$0xff]
    %v54 = vpack.c.bf16 %v53, %v53
    %v55 = vld [vmem:[#allocation2] sm:$0xf]
    %v56 = vld [vmem:[#allocation2 + $0x4] sm:$0xf]
    %v57 = vld [vmem:[#allocation2 + $0x8] sm:$0xf]
    %v58 = vld [vmem:[#allocation2 + $0xc] sm:$0xf]
    %v59 = vld [vmem:[%s2] sm:$0x1]
    %v61 = vlaneseq
    %v62 = vshrl.u32 %v61, 7
    %v63 = vsub.s32 0, %v62
    %v64 = vrot.slane %v59, %v63
    %v70 = vunpack.c.l.b16 %v55
    %v71 = vunpack.c.l.b16 %v56
    %v72 = vunpack.c.l.b16 %v57
    %v73 = vunpack.c.l.b16 %v58
    %v74 = vpack.c.b16 %v71, %v70
    %v75 = vpack.c.b16 %v73, %v72
    %vm78 = vcmask 261120
    %v80 = vsel %vm78, %v54, 0
    %82 = vmatprep.subr.bf16.mxu0 0
    %83 = vmatpush1.bf16.msra.mxu0 0
    %84 = vmatprep.subr.bf16.mxu0 0
    %85 = vmatpush1.bf16.msra.mxu0 0
    %86 = vmatprep.subr.bf16.mxu0 0
    %87 = vmatpush1.bf16.msra.mxu0 0
    %88 = vmatprep.subr.bf16.mxu0 0
    %89 = vmatpush1.bf16.msra.mxu0 0
    %90 = vmatprep.subr.bf16.mxu0 0
    %91 = vmatpush1.bf16.msra.mxu0 0
    %92 = vmatprep.subr.bf16.mxu0 0
    %93 = vmatpush1.bf16.msra.mxu0 0
    %94 = vmatprep.subr.bf16.mxu0 0
    %95 = vmatpush1.bf16.msra.mxu0 %v75
    %96 = vmatprep.subr.bf16.mxu0 0
    %97 = vmatpush1.bf16.msra.mxu0 %v74
    %98 = vmatprep.subr.bf16.mxu0 0
    %99 = vmatpush2.bf16.msra.mxu0 0
    %100 = vmatprep.subr.bf16.mxu0 0
    %101 = vmatpush2.bf16.msra.mxu0 0
    %102 = vmatprep.subr.bf16.mxu0 0
    %103 = vmatpush2.bf16.msra.mxu0 0
    %104 = vmatprep.subr.bf16.mxu0 0
    %105 = vmatpush2.bf16.msra.mxu0 0
    %106 = vmatprep.subr.bf16.mxu0 0
    %107 = vmatpush2.bf16.msra.mxu0 0
    %108 = vmatprep.subr.bf16.mxu0 0
    %109 = vmatpush2.bf16.msra.mxu0 0
    %110 = vmatprep.subr.bf16.mxu0 0
    %111 = vmatpush2.bf16.msra.mxu0 0
    %112 = vmatprep.subr.bf16.mxu0 0
    %113 = vmatpush2.bf16.msra.mxu0 0
    %114 = vmatprep.mubr.bf16.mxu0 0
    %115 = vmatmul.mubr.bf16.gmra.mxu0 %v80
    %v116 = vpop.f32.mrf.mxu0
    %v117 = vadd.f32 %v64, %v116
    %v118 = vpop.f32.mrf.mxu0
    %v119 = vpop.f32.mrf.mxu0
    %v120 = vpop.f32.mrf.mxu0
    %121 = vdwg.mxu0
    %v122 = vmax.f32 %v117, 0.0
    %v123 = vpack.c.bf16 %v122, %v122
    %v124 = vld [vmem:[%s3] sm:$0xf]
    %v125 = vld [vmem:[%s3 + $0x4] sm:$0xf]
    %v126 = vld [vmem:[%s3 + $0x8] sm:$0xf]
    %v127 = vld [vmem:[%s3 + $0xc] sm:$0xf]
    %v128 = vld [vmem:[%s3 + $0x10] sm:$0xf]
    %v129 = vld [vmem:[%s3 + $0x14] sm:$0xf]
    %v130 = vld [vmem:[%s3 + $0x18] sm:$0xf]
    %v131 = vld [vmem:[%s3 + $0x1c] sm:$0xf]
    %v132 = vld [vmem:[%s3 + $0x20] sm:$0xf]
    %v133 = vld [vmem:[%s3 + $0x24] sm:$0xf]
    %v134 = vld [vmem:[%s3 + $0x28] sm:$0xf]
    %v135 = vld [vmem:[%s3 + $0x2c] sm:$0xf]
    %v136 = vld [vmem:[%s3 + $0x30] sm:$0xf]
    %v137 = vld [vmem:[%s3 + $0x34] sm:$0xf]
    %v138 = vld [vmem:[%s3 + $0x38] sm:$0xf]
    %v139 = vld [vmem:[%s3 + $0x3c] sm:$0xf]
    %v140 = vld [vmem:[%s4] sm:$0x1]
    %v142 = vlaneseq
    %v143 = vshrl.u32 %v142, 7
    %v144 = vsub.s32 0, %v143
    %v145 = vrot.slane %v140, %v144
    %v163 = vunpack.c.l.b16 %v124
    %v164 = vunpack.c.l.b16 %v125
    %v165 = vunpack.c.l.b16 %v126
    %v166 = vunpack.c.l.b16 %v127
    %v167 = vunpack.c.l.b16 %v128
    %v168 = vunpack.c.l.b16 %v129
    %v169 = vunpack.c.l.b16 %v130
    %v170 = vunpack.c.l.b16 %v131
    %v171 = vunpack.c.l.b16 %v132
    %v172 = vunpack.c.l.b16 %v133
    %v173 = vunpack.c.l.b16 %v134
    %v174 = vunpack.c.l.b16 %v135
    %v175 = vunpack.c.l.b16 %v136
    %v176 = vunpack.c.l.b16 %v137
    %v177 = vunpack.c.l.b16 %v138
    %v178 = vunpack.c.l.b16 %v139
    %v179 = vpack.c.b16 %v164, %v163
    %v180 = vpack.c.b16 %v166, %v165
    %v181 = vpack.c.b16 %v168, %v167
    %v182 = vpack.c.b16 %v170, %v169
    %v183 = vpack.c.b16 %v172, %v171
    %v184 = vpack.c.b16 %v174, %v173
    %v185 = vpack.c.b16 %v176, %v175
    %v186 = vpack.c.b16 %v178, %v177
    %195 = vmatprep.subr.bf16.mxu0 0
    %196 = vmatpush1.bf16.msra.mxu0 %v186
    %197 = vmatprep.subr.bf16.mxu0 0
    %198 = vmatpush1.bf16.msra.mxu0 %v185
    %199 = vmatprep.subr.bf16.mxu0 0
    %200 = vmatpush1.bf16.msra.mxu0 %v184
    %201 = vmatprep.subr.bf16.mxu0 0
    %202 = vmatpush1.bf16.msra.mxu0 %v183
    %203 = vmatprep.subr.bf16.mxu0 0
    %204 = vmatpush1.bf16.msra.mxu0 %v182
    %205 = vmatprep.subr.bf16.mxu0 0
    %206 = vmatpush1.bf16.msra.mxu0 %v181
    %207 = vmatprep.subr.bf16.mxu0 0
    %208 = vmatpush1.bf16.msra.mxu0 %v180
    %209 = vmatprep.subr.bf16.mxu0 0
    %210 = vmatpush1.bf16.msra.mxu0 %v179
    %211 = vmatprep.subr.bf16.mxu0 0
    %212 = vmatpush2.bf16.msra.mxu0 0
    %213 = vmatprep.subr.bf16.mxu0 0
    %214 = vmatpush2.bf16.msra.mxu0 0
    %215 = vmatprep.subr.bf16.mxu0 0
    %216 = vmatpush2.bf16.msra.mxu0 0
    %217 = vmatprep.subr.bf16.mxu0 0
    %218 = vmatpush2.bf16.msra.mxu0 0
    %219 = vmatprep.subr.bf16.mxu0 0
    %220 = vmatpush2.bf16.msra.mxu0 0
    %221 = vmatprep.subr.bf16.mxu0 0
    %222 = vmatpush2.bf16.msra.mxu0 0
    %223 = vmatprep.subr.bf16.mxu0 0
    %224 = vmatpush2.bf16.msra.mxu0 0
    %225 = vmatprep.subr.bf16.mxu0 0
    %226 = vmatpush2.bf16.msra.mxu0 0
    %227 = vmatprep.mubr.bf16.mxu0 0
    %228 = vmatmul.mubr.bf16.gmra.mxu0 %v123
    %v229 = vpop.f32.mrf.mxu0
    %v230 = vadd.f32 %v145, %v229
    %v231 = vpop.f32.mrf.mxu0
    %v232 = vpop.f32.mrf.mxu0
    %v233 = vpop.f32.mrf.mxu0
    %234 = vdwg.mxu0
    %v235 = vmax.f32 %v230, 0.0
    %v236 = vpack.c.bf16 %v235, %v235
    %v237 = vld [vmem:[%s5] sm:$0xf]
    %v238 = vld [vmem:[%s5 + $0x4] sm:$0xf]
    %v239 = vld [vmem:[%s5 + $0x8] sm:$0xf]
    %v240 = vld [vmem:[%s5 + $0xc] sm:$0xf]
    %v241 = vld [vmem:[%s5 + $0x10] sm:$0xf]
    %v242 = vld [vmem:[%s5 + $0x14] sm:$0xf]
    %v243 = vld [vmem:[%s5 + $0x18] sm:$0xf]
    %v244 = vld [vmem:[%s5 + $0x1c] sm:$0xf]
    %v245 = vld [vmem:[%s5 + $0x20] sm:$0xf]
    %v246 = vld [vmem:[%s5 + $0x24] sm:$0xf]
    %v247 = vld [vmem:[%s5 + $0x28] sm:$0xf]
    %v248 = vld [vmem:[%s5 + $0x2c] sm:$0xf]
    %v249 = vld [vmem:[%s5 + $0x30] sm:$0xf]
    %v250 = vld [vmem:[%s5 + $0x34] sm:$0xf]
    %v251 = vld [vmem:[%s5 + $0x38] sm:$0xf]
    %v252 = vld [vmem:[%s5 + $0x3c] sm:$0xf]
    %v253 = vld [vmem:[#allocation4] sm:$0x1]
    %v255 = vlaneseq
    %v256 = vshrl.u32 %v255, 7
    %v257 = vsub.s32 0, %v256
    %v258 = vrot.slane %v253, %v257
    %v276 = vunpack.c.l.b16 %v237
    %v277 = vunpack.c.l.b16 %v238
    %v278 = vunpack.c.l.b16 %v239
    %v279 = vunpack.c.l.b16 %v240
    %v280 = vunpack.c.l.b16 %v241
    %v281 = vunpack.c.l.b16 %v242
    %v282 = vunpack.c.l.b16 %v243
    %v283 = vunpack.c.l.b16 %v244
    %v284 = vunpack.c.l.b16 %v245
    %v285 = vunpack.c.l.b16 %v246
    %v286 = vunpack.c.l.b16 %v247
    %v287 = vunpack.c.l.b16 %v248
    %v288 = vunpack.c.l.b16 %v249
    %v289 = vunpack.c.l.b16 %v250
    %v290 = vunpack.c.l.b16 %v251
    %v291 = vunpack.c.l.b16 %v252
    %v292 = vpack.c.b16 %v277, %v276
    %v293 = vpack.c.b16 %v279, %v278
    %v294 = vpack.c.b16 %v281, %v280
    %v295 = vpack.c.b16 %v283, %v282
    %v296 = vpack.c.b16 %v285, %v284
    %v297 = vpack.c.b16 %v287, %v286
    %v298 = vpack.c.b16 %v289, %v288
    %v299 = vpack.c.b16 %v291, %v290
    %308 = vmatprep.subr.bf16.mxu0 0
    %309 = vmatpush1.bf16.msra.mxu0 %v299
    %310 = vmatprep.subr.bf16.mxu0 0
    %311 = vmatpush1.bf16.msra.mxu0 %v298
    %312 = vmatprep.subr.bf16.mxu0 0
    %313 = vmatpush1.bf16.msra.mxu0 %v297
    %314 = vmatprep.subr.bf16.mxu0 0
    %315 = vmatpush1.bf16.msra.mxu0 %v296
    %316 = vmatprep.subr.bf16.mxu0 0
    %317 = vmatpush1.bf16.msra.mxu0 %v295
    %318 = vmatprep.subr.bf16.mxu0 0
    %319 = vmatpush1.bf16.msra.mxu0 %v294
    %320 = vmatprep.subr.bf16.mxu0 0
    %321 = vmatpush1.bf16.msra.mxu0 %v293
    %322 = vmatprep.subr.bf16.mxu0 0
    %323 = vmatpush1.bf16.msra.mxu0 %v292
    %324 = vmatprep.subr.bf16.mxu0 0
    %325 = vmatpush2.bf16.msra.mxu0 0
    %326 = vmatprep.subr.bf16.mxu0 0
    %327 = vmatpush2.bf16.msra.mxu0 0
    %328 = vmatprep.subr.bf16.mxu0 0
    %329 = vmatpush2.bf16.msra.mxu0 0
    %330 = vmatprep.subr.bf16.mxu0 0
    %331 = vmatpush2.bf16.msra.mxu0 0
    %332 = vmatprep.subr.bf16.mxu0 0
    %333 = vmatpush2.bf16.msra.mxu0 0
    %334 = vmatprep.subr.bf16.mxu0 0
    %335 = vmatpush2.bf16.msra.mxu0 0
    %336 = vmatprep.subr.bf16.mxu0 0
    %337 = vmatpush2.bf16.msra.mxu0 0
    %338 = vmatprep.subr.bf16.mxu0 0
    %339 = vmatpush2.bf16.msra.mxu0 0
    %340 = vmatprep.mubr.bf16.mxu0 0
    %341 = vmatmul.mubr.bf16.gmra.mxu0 %v236
    %v342 = vpop.f32.mrf.mxu0
    %v343 = vadd.f32 %v258, %v342
    %v344 = vpop.f32.mrf.mxu0
    %v345 = vpop.f32.mrf.mxu0
    %v346 = vpop.f32.mrf.mxu0
    %347 = vdwg.mxu0
    %vm348 = vcmask 31744
    %349 = vst.msk [vmem:[%s7] sm:$0xff] %vm348, %v343
    // Predicated region
    $region38: #{chance_encoder_backbone_mlp.1} parent=1 // pred_check
      _
    $region39: #{chance_encoder_backbone_mlp.1} parent=1 // pred_check_branch
      %351 = sbr.rel (0) target = $region41
    $region40: #{chance_encoder_backbone_mlp.1} parent=1 // pred_region
      _
    $region41: #{chance_encoder_backbone_mlp.1} parent=1 // pred_fallthru
      _
    // Predicated region
    $region42: #{chance_encoder_backbone_mlp.1} parent=1 // pred_check
      _
    $region43: #{chance_encoder_backbone_mlp.1} parent=1 // pred_check_branch
      %353 = sbr.rel (0) target = $region45
    $region44: #{chance_encoder_backbone_mlp.1} parent=1 // pred_region
      _
    $region45: #{chance_encoder_backbone_mlp.1} parent=1 // pred_fallthru
      _
    %354 = vsyncpa [#allocation3], 1
    %355 = vsyncpa [#allocation5], 1

</llo_original>
